<compile_context>
chip_gen: v5e
topology: v5e:2x2
jax: 0.10.0
libtpu: 0.0.40
codegen_flags: <defaults>
</compile_context>

<pallas_src>
import math

import jax
import jax.numpy as jnp
from jax.experimental import pallas as pl
from jax.experimental.pallas import tpu as pltpu


def _round_up(a: int, b: int) -> int:
    return (a + b - 1) // b * b


def _lut_select_kernel(lut_ref, x_ref, o_ref):
    """lut_ref: SMEM (5,) f32 = [sp(w0+b), sp(w1+b), sp(w2+b), sp(w3+b), sp(b)].

    x_ref: VMEM (block_rows, lane) integer;  o_ref: VMEM (block_rows, lane) f32.
    """
    # Widen once to i32.  This VPU-side unpack is fully hidden under the HBM
    # DMA (kernel is memory-bound) and keeps the mask/select lowering on plain
    # 32-bit layouts across Mosaic versions.
    x = x_ref[...].astype(jnp.int32)
    bit0 = (x & 1) == 1
    bit1 = (x & 2) == 2
    lo = jnp.where(bit0, lut_ref[1], lut_ref[0])
    hi = jnp.where(bit0, lut_ref[3], lut_ref[2])
    val = jnp.where(bit1, hi, lo)
    # Out-of-range index -> one_hot row of zeros -> softplus(bias). Matches the
    # jax.nn.one_hot reference (torch F.one_hot would raise instead).
    in_range = jnp.logical_and(x >= 0, x < 4)
    o_ref[...] = jnp.where(in_range, val, lut_ref[4])


def linear_forward(x_idx, weight, bias, *, block_rows_pref=1024):
    """x_idx: integer indices (any shape); weight: (1, 4); bias: (1,).

    Returns softplus(one_hot(x, 4) @ weight.T + bias) with shape x.shape + (1,).
    """
    orig_shape = x_idx.shape
    n = math.prod(orig_shape)

    # Precompute the 4 possible outputs (+ out-of-range entry) outside the kernel.
    w_flat = weight.reshape(4).astype(jnp.float32)
    b_scalar = bias.reshape(()).astype(jnp.float32)
    lut = jnp.concatenate(
        [jax.nn.softplus(w_flat + b_scalar),
         jax.nn.softplus(b_scalar)[None]]).astype(jnp.float32)

    if n == 0:
        return jnp.zeros(orig_shape + (1,), jnp.float32)

    # Keep the index dtype: uint8/int8 stream 1 B/elem, int32 streams 4 B/elem
    # directly; do NOT narrow wide dtypes to int8 (extra un-hidden XLA pass and
    # mod-256 wrap of grossly out-of-range indices).
    if x_idx.dtype not in (jnp.uint8, jnp.int8, jnp.int32, jnp.uint32):
        x_idx = x_idx.astype(jnp.int32)

    # Pick the largest lane width in {1024, 512, 256, 128} that divides n so
    # the reshape is copy-free (pad == 0, no y[:n] slice).  Fall back to 128
    # lanes with minimal padding otherwise.
    lane = None
    for cand in (1024, 512, 256, 128):
        if n % cand == 0:
            lane = cand
            break
    if lane is None:
        lane = 128
    rows = pl.cdiv(n, lane)
    pad = rows * lane - n

    x_flat = x_idx.reshape(-1)
    if pad:
        x_flat = jnp.pad(x_flat, (0, pad))
    x_slab = x_flat.reshape(rows, lane)

    # Block rows: multiple of 32 (int8 sublane tile; also covers i32's 8).
    block_rows = min(block_rows_pref, _round_up(rows, 32))
    if rows >= 64:
        # Ensure >= 2 grid steps so the "parallel" axis can feed both v7x TCs.
        block_rows = min(block_rows, _round_up(pl.cdiv(rows, 2), 32))
    elif block_rows > rows:
        block_rows = rows  # single exact full block for tiny inputs
    grid_rows = pl.cdiv(rows, block_rows)

    out = pl.pallas_call(
        _lut_select_kernel,
        out_shape=jax.ShapeDtypeStruct((rows, lane), jnp.float32),
        grid=(grid_rows,),
        in_specs=[
            pl.BlockSpec(memory_space=pltpu.MemorySpace.SMEM),     # lut (5,)
            pl.BlockSpec((block_rows, lane), lambda i: (i, 0)),    # x slab
        ],
        out_specs=pl.BlockSpec((block_rows, lane), lambda i: (i, 0)),
        compiler_params=pltpu.CompilerParams(
            dimension_semantics=("parallel",),
            vmem_limit_bytes=32 << 20),
    )(lut, x_slab)

    y = out.reshape(-1)
    if pad:
        y = y[:n]
    return y.reshape(orig_shape + (1,))


def _reference(x_idx, weight, bias):
    oh = jax.nn.one_hot(x_idx, 4, dtype=jnp.float32)
    y = oh @ weight.T.astype(jnp.float32) + bias.astype(jnp.float32)
    return jax.nn.softplus(y)


if __name__ == "__main__":
    key = jax.random.PRNGKey(0)
    k_x, k_w, k_b = jax.random.split(key, 3)

    # torch.nn.Linear(4, 1) default init: U(-1/sqrt(4), 1/sqrt(4))
    bound = 0.5
    weight = jax.random.uniform(k_w, (1, 4), jnp.float32, -bound, bound)
    bias = jax.random.uniform(k_b, (1,), jnp.float32, -bound, bound)

    # Small DNA index input: batch=2, seq=256, values in [0, 4), uint8 like torch
    B, S = 2, 256
    x = jax.random.randint(k_x, (B, S), 0, 4, dtype=jnp.int32).astype(jnp.uint8)

    y = linear_forward(x, weight, bias)
    y = jax.block_until_ready(y)

    y_ref = _reference(x.astype(jnp.int32), weight, bias)
    assert y.shape == (B, S, 1), y.shape
    assert jnp.allclose(y, y_ref, atol=1e-6, rtol=1e-6), "mismatch vs reference"

    print("KERNEL_OK")
</pallas_src>

<mosaic_0001>
module attributes {stable_mosaic.version = 11 : i64} {
  func.func @_lut_select_kernel(%arg0: i32, %arg1: memref<5xf32, #tpu.memory_space<smem>>, %arg2: memref<1x512xi8, #tpu.memory_space<vmem>>, %arg3: memref<1x512xf32, #tpu.memory_space<vmem>>) attributes {dimension_semantics = [#tpu.dimension_semantics<parallel>], iteration_bounds = array<i64: 1>, scalar_prefetch = 0 : i64, scratch_operands = 0 : i64, tpu.core_type = #tpu.core_type<tc>, window_params = [{transform_indices = @transform_0, window_bounds = array<i64: 5>}, {transform_indices = @transform_1, window_bounds = array<i64: 1, 512>}, {transform_indices = @transform_2, window_bounds = array<i64: 1, 512>}]} {
    %c0 = arith.constant 0 : index
    %c0_0 = arith.constant 0 : index
    %0 = vector.load %arg2[%c0, %c0_0] : memref<1x512xi8, #tpu.memory_space<vmem>>, vector<1x512xi8>
    %1 = arith.extui %0 : vector<1x512xi8> to vector<1x512xi32>
    %c1_i32 = arith.constant 1 : i32
    %2 = vector.broadcast %c1_i32 : i32 to vector<1x512xi32>
    %3 = arith.andi %1, %2 : vector<1x512xi32>
    %c1_i32_1 = arith.constant 1 : i32
    %4 = vector.broadcast %c1_i32_1 : i32 to vector<1x512xi32>
    %5 = arith.cmpi eq, %3, %4 : vector<1x512xi32>
    %c2_i32 = arith.constant 2 : i32
    %6 = vector.broadcast %c2_i32 : i32 to vector<1x512xi32>
    %7 = arith.andi %1, %6 : vector<1x512xi32>
    %c2_i32_2 = arith.constant 2 : i32
    %8 = vector.broadcast %c2_i32_2 : i32 to vector<1x512xi32>
    %9 = arith.cmpi eq, %7, %8 : vector<1x512xi32>
    %c1 = arith.constant 1 : index
    %10 = memref.load %arg1[%c1] : memref<5xf32, #tpu.memory_space<smem>>
    %c0_3 = arith.constant 0 : index
    %11 = memref.load %arg1[%c0_3] : memref<5xf32, #tpu.memory_space<smem>>
    %12 = vector.broadcast %10 : f32 to vector<1x512xf32>
    %13 = vector.broadcast %11 : f32 to vector<1x512xf32>
    %14 = arith.select %5, %12, %13 : vector<1x512xi1>, vector<1x512xf32>
    %c3 = arith.constant 3 : index
    %15 = memref.load %arg1[%c3] : memref<5xf32, #tpu.memory_space<smem>>
    %c2 = arith.constant 2 : index
    %16 = memref.load %arg1[%c2] : memref<5xf32, #tpu.memory_space<smem>>
    %17 = vector.broadcast %15 : f32 to vector<1x512xf32>
    %18 = vector.broadcast %16 : f32 to vector<1x512xf32>
    %19 = arith.select %5, %17, %18 : vector<1x512xi1>, vector<1x512xf32>
    %20 = arith.select %9, %19, %14 : vector<1x512xi1>, vector<1x512xf32>
    %c0_i32 = arith.constant 0 : i32
    %21 = vector.broadcast %c0_i32 : i32 to vector<1x512xi32>
    %22 = arith.cmpi sge, %1, %21 : vector<1x512xi32>
    %c4_i32 = arith.constant 4 : i32
    %23 = vector.broadcast %c4_i32 : i32 to vector<1x512xi32>
    %24 = arith.cmpi slt, %1, %23 : vector<1x512xi32>
    %25 = arith.andi %22, %24 : vector<1x512xi1>
    %c4 = arith.constant 4 : index
    %26 = memref.load %arg1[%c4] : memref<5xf32, #tpu.memory_space<smem>>
    %27 = vector.broadcast %26 : f32 to vector<1x512xf32>
    %28 = arith.select %25, %20, %27 : vector<1x512xi1>, vector<1x512xf32>
    %c0_4 = arith.constant 0 : index
    %c0_5 = arith.constant 0 : index
    %29 = vector.load %arg3[%c0_4, %c0_5] : memref<1x512xf32, #tpu.memory_space<vmem>>, vector<1x512xf32>
    tpu.vector_store %arg3[%c0_4, %c0_5], %28 {strides = array<i32>} : memref<1x512xf32, #tpu.memory_space<vmem>>, vector<1x512xf32>,
    return
  }
  func.func @transform_0(%arg0: i32) -> i32 {
    %c0_i32 = arith.constant 0 : i32
    %c0_i32_0 = arith.constant 0 : i32
    return %c0_i32 : i32
  }
  func.func @transform_1(%arg0: i32) -> (i32, i32) {
    %c0_i32 = arith.constant 0 : i32
    %c0_i32_0 = arith.constant 0 : i32
    return %arg0, %c0_i32 : i32, i32
  }
  func.func @transform_2(%arg0: i32) -> (i32, i32) {
    %c0_i32 = arith.constant 0 : i32
    %c0_i32_0 = arith.constant 0 : i32
    return %arg0, %c0_i32 : i32, i32
  }
}

</mosaic_0001>

<llo_original>
// kernel: tpu_custom_call.1
$region0: #{tpu_custom_call.1}
  #allocation0 [shape = 'u32[]', space=smem, size = 0x4, offset = 0x4, fixed_abs, tag = 'smem constant byte address 0x4 - core index']
  #allocation1 [shape = 'u32[72,128]{1,0:T(1,128)}', space=vmem, size = 0x9000, scoped, tag = 'internal scratch']
  %s0 = inlined_call_operand.hbm [shape: f32[5], index: 0, kind: input, shape index: {}]
  %s1 = inlined_call_operand.hbm [shape: u8[1,512], index: 1, kind: input, shape index: {}]
  %s2 = inlined_call_operand.hbm [shape: f32[1,512], index: 2, kind: output, shape index: {}]
  %s3 = sld [smem:[#allocation0]]
  $region26: #{tpu_custom_call.1} parent=0
    _
  %s5 = ssub.s32 1, %s3
  %s6 = scalar_select 0, %s5, %s3
  $region1: #{tpu_custom_call.1} parent=0
    #allocation2 [shape = 'u8[512]{0}', space=smem, size = 0x200, scoped, tag = 'input window, operand 0, single buffered']
    #allocation3 [shape = 's32[1]{0}', space=sflag, size = 0x4, scoped, tag = 'scoped memory for tpu_custom_call.1']
    #allocation4 [shape = 's32[1]{0}', space=sflag, size = 0x4, scoped, tag = 'scoped memory for tpu_custom_call.1']
    #allocation5 [shape = 's32[1]{0}', space=sflag, size = 0x4, scoped, tag = 'scoped memory for tpu_custom_call.1']
    #allocation6 [shape = 'u8[2048]{0}', space=vmem, size = 0x800, scoped, tag = 'input window, operand 1, single buffered']
    #allocation7 [shape = 'u8[2048]{0}', space=vmem, size = 0x800, scoped, tag = 'output window, operand 0, single buffered']
    %7 = vsyncpa [#allocation5], 0
    %8 = vsyncpa [#allocation3], 0
    %9 = vsyncpa [#allocation4], 0
    // Predicated region
    $region2: #{tpu_custom_call.1} parent=1 // pred_check
      _
    $region3: #{tpu_custom_call.1} parent=1 // pred_check_branch
      %11 = sbr.rel (0) target = $region5
    $region4: #{tpu_custom_call.1} parent=1 // pred_region
      %13 = vsyncadd [#allocation5], 0
      %s15 = sshll.u32 %s0, 4
      %s16 = int_to_ptr.hbm [resolvable:$true] %s15
      %18 = dma.hbm_to_smem %s16, 16, [#allocation2], [#allocation5]
    $region5: #{tpu_custom_call.1} parent=1 // pred_fallthru
      _
    // Predicated region
    $region6: #{tpu_custom_call.1} parent=1 // pred_check
      _
    $region7: #{tpu_custom_call.1} parent=1 // pred_check_branch
      %20 = sbr.rel (0) target = $region9
    $region8: #{tpu_custom_call.1} parent=1 // pred_region
      %22 = vsyncadd [#allocation3], 0
      %s24 = sshll.u32 %s1, 4
      %s25 = int_to_ptr.hbm [resolvable:$true] %s24
      %s26 = sshll.u32 [#allocation6], 4
      %s27 = int_to_ptr.vmem [resolvable:$true] %s26
      %29 = dma.hbm_to_vmem [thread:$0]  %s25, 64, %s27, [#allocation3]
    $region9: #{tpu_custom_call.1} parent=1 // pred_fallthru
      _
    // Predicated region
    $region10: #{tpu_custom_call.1} parent=1 // pred_check
      _
    $region11: #{tpu_custom_call.1} parent=1 // pred_check_branch
      %31 = sbr.rel (0) target = $region13
    $region12: #{tpu_custom_call.1} parent=1 // pred_region
      %33 = dma.done [#allocation5], 16
    $region13: #{tpu_custom_call.1} parent=1 // pred_fallthru
      _
    // Predicated region
    $region14: #{tpu_custom_call.1} parent=1 // pred_check
      _
    $region15: #{tpu_custom_call.1} parent=1 // pred_check_branch
      %35 = sbr.rel (0) target = $region17
    $region16: #{tpu_custom_call.1} parent=1 // pred_region
      %37 = dma.done [#allocation3], 64
    $region17: #{tpu_custom_call.1} parent=1 // pred_fallthru
      _
    %38 = sfence
    %v39 = vld [vmem:[#allocation6] sm:$0xf]
    %v40 = vunpack.c.0.s8 %v39
    %v41 = vunpack.c.1.s8 %v39
    %v42 = vand.u32 %v40, 255
    %v43 = vand.u32 %v41, 255
    %v44 = vand.u32 %v42, 1
    %v45 = vand.u32 %v43, 1
    %vm46 = vcmp.eq.s32.totalorder %v44, 1
    %vm47 = vcmp.eq.s32.totalorder %v45, 1
    %v48 = vand.u32 %v42, 2
    %v49 = vand.u32 %v43, 2
    %vm50 = vcmp.eq.s32.totalorder %v48, 2
    %vm51 = vcmp.eq.s32.totalorder %v49, 2
    %s52 = sld [smem:[#allocation2 + $0x1]]
    %s53 = sld [smem:[#allocation2]]
    %v54 = vstv %s52
    %v55 = vstv %s53
    %v56 = vsel %vm46, %v54, %v55
    %v57 = vsel %vm47, %v54, %v55
    %s58 = sld [smem:[#allocation2 + $0x3]]
    %s59 = sld [smem:[#allocation2 + $0x2]]
    %v60 = vstv %s58
    %v61 = vstv %s59
    %v62 = vsel %vm46, %v60, %v61
    %v63 = vsel %vm47, %v60, %v61
    %v64 = vsel %vm50, %v62, %v56
    %v65 = vsel %vm51, %v63, %v57
    %vm66 = vcmp.ge.s32.totalorder %v42, 0
    %vm67 = vcmp.ge.s32.totalorder %v43, 0
    %vm68 = vcmp.lt.s32.totalorder %v42, 4
    %vm69 = vcmp.lt.s32.totalorder %v43, 4
    %vm70 = vmand %vm66, %vm68
    %vm71 = vmand %vm67, %vm69
    %s72 = sld [smem:[#allocation2 + $0x4]]
    %v73 = vstv %s72
    %v74 = vsel %vm70, %v64, %v73
    %v75 = vsel %vm71, %v65, %v73
    %v78 = vrot.slane %v74, 3
    %v79 = vrot.slane %v75, 6
    %v80 = vrot.slane %v75, 1
    %vm81 = vcmask 1040384
    %v82 = vsel %vm81, %v74, %v78
    %vm83 = vcmask 1042434
    %v84 = vsel %vm83, %v79, %v80
    %vm85 = vcmask 1041408
    %v86 = vsel %vm85, %v82, %v84
    %v88 = vlaneseq
    %vm89 = vcmp.ge.s32.totalorder %v88, 0
    %vm90 = vcmp.lt.s32.totalorder %v88, 512
    %vm91 = vmand %vm89, %vm90
    %92 = vst.msk [vmem:[#allocation7] sm:$0xf] %vm91, %v86
    // Predicated region
    $region18: #{tpu_custom_call.1} parent=1 // pred_check
      _
    $region19: #{tpu_custom_call.1} parent=1 // pred_check_branch
      %94 = sbr.rel (0) target = $region21
    $region20: #{tpu_custom_call.1} parent=1 // pred_region
      %96 = vsyncadd [#allocation4], 0
      %s98 = sshll.u32 [#allocation7], 4
      %s99 = int_to_ptr.vmem [resolvable:$true] %s98
      %s100 = sshll.u32 %s2, 4
      %s101 = int_to_ptr.hbm [resolvable:$true] %s100
      %103 = dma.vmem_to_hbm [thread:$0]  %s99, 64, %s101, [#allocation4]
    $region21: #{tpu_custom_call.1} parent=1 // pred_fallthru
      _
    // Predicated region
    $region22: #{tpu_custom_call.1} parent=1 // pred_check
      _
    $region23: #{tpu_custom_call.1} parent=1 // pred_check_branch
      %105 = sbr.rel (0) target = $region25
    $region24: #{tpu_custom_call.1} parent=1 // pred_region
      %107 = dma.done [#allocation4], 64
    $region25: #{tpu_custom_call.1} parent=1 // pred_fallthru
      _
    %108 = vsyncpa [#allocation3], 1
    %109 = vsyncpa [#allocation4], 1
    %110 = vsyncpa [#allocation5], 1

</llo_original>
